<compile_context>
chip_gen: v7x
topology: tpu7x:2x2x1
jax: 0.10.0
libtpu: 0.0.40
codegen_flags: <defaults>
</compile_context>

<pallas_src>
import functools

import jax
import jax.numpy as jnp
from jax.experimental import pallas as pl
from jax.experimental.pallas import tpu as pltpu


def feature_extractor_kernel(patches_ref, conv_w_ref, conv_b_ref,
                             head_wt_ref, head_b_ref, out_ref, *, batch, hw):
    # Conv2d(3x3, pad=1) over the WHOLE batch as one lane-dense MXU matmul:
    #   [OC, k_pad] (bf16) @ [k_pad, B*H*W] (bf16) -> [OC, B*H*W], f32 acc.
    conv = jnp.dot(conv_w_ref[...], patches_ref[...],
                   preferred_element_type=jnp.float32)
    conv = jnp.maximum(conv + conv_b_ref[...], 0.0)          # bias + ReLU (VPU, f32)

    # Dropout(p=0.0) is the identity.
    # TODO(synk): for p > 0 in training mode, mask the pooled features here via
    # pltpu.prng_seed + pltpu.stateful_bernoulli.

    head_wt = head_wt_ref[...]                                # [OC, NUM_OUT] f32 (VPU math)
    inv_hw = 1.0 / hw
    rows = []
    for b in range(batch):                                    # static unroll, B is tiny
        # Global average pool for batch b: 128-aligned lane slice + lane reduce.
        p = jnp.sum(conv[:, b * hw:(b + 1) * hw],
                    axis=1, keepdims=True) * inv_hw           # [OC, 1]
        # Linear head on the VPU/XLU (no MXU push for a degenerate N=1 matmul):
        #   logits_b[n] = sum_oc p[oc] * head_wt[oc, n]
        rows.append(jnp.sum(p * head_wt, axis=0, keepdims=True))   # [1, NUM_OUT]
    logits = jnp.concatenate(rows, axis=0) + head_b_ref[...]       # [B, NUM_OUT]
    out_ref[...] = logits                                     # full lane-dense block


def feature_extractor(x, conv_w, conv_b, head_w, head_b):
    """x: NCHW float32 [B, C, H, W].  Returns [B, NUM_OUT] float32."""
    B, C, H, W = x.shape
    OC = conv_w.shape[0]
    NUM_OUT = head_w.shape[0]
    KH = KW = 3
    HW = H * W
    k_in = C * KH * KW
    # bf16 packs 16 rows per vreg; pad K up so patch/weight loads are full tiles.
    k_pad = ((k_in + 15) // 16) * 16

    # --- im2col glue, built directly in the lane-major [k_pad, B*H*W] layout ---
    # Transpose BEFORE the 9x patch expansion (cheap, original-sized tensor) and
    # do the expansion in bf16 to halve glue HBM traffic.
    xt = jnp.transpose(x, (1, 0, 2, 3)).astype(jnp.bfloat16)        # [C, B, H, W]
    xp = jnp.pad(xt, ((0, 0), (0, 0), (1, 1), (1, 1)))              # zero pad=1
    shifts = [xp[:, :, dh:dh + H, dw:dw + W]                        # [C, B, H, W]
              for dh in range(KH) for dw in range(KW)]
    patches = jnp.stack(shifts, axis=1).reshape(k_in, B * HW)       # [k_in, B*HW]
    patches = jnp.pad(patches, ((0, k_pad - k_in), (0, 0)))         # [k_pad, B*HW]

    # Conv weight [OC, C, 3, 3] -> [OC, k_pad]  (C outer, k inner: matches patches).
    conv_w_mat = jnp.pad(conv_w.reshape(OC, k_in).astype(jnp.bfloat16),
                         ((0, 0), (0, k_pad - k_in)))
    conv_b_col = conv_b.reshape(OC, 1).astype(jnp.float32)
    # Head stays f32: it runs on the VPU/XLU (v5e has no bf16 VPU/EUP).
    head_wt = head_w.T.astype(jnp.float32)                          # [OC, NUM_OUT]
    head_b_row = head_b.reshape(1, NUM_OUT).astype(jnp.float32)

    kernel = functools.partial(feature_extractor_kernel, batch=B, hw=HW)

    return pl.pallas_call(
        kernel,
        out_shape=jax.ShapeDtypeStruct((B, NUM_OUT), jnp.float32),
        grid_spec=pl.GridSpec(
            # Single grid step: per-step fixed cost (~0.35 us) dwarfs the
            # ~0.3 MFLOP of real work, so don't tile or megacore-split here.
            grid=(1,),
            in_specs=[
                pl.BlockSpec((k_pad, B * HW), lambda i: (0, 0)),
                pl.BlockSpec((OC, k_pad), lambda i: (0, 0)),
                pl.BlockSpec((OC, 1), lambda i: (0, 0)),
                pl.BlockSpec((OC, NUM_OUT), lambda i: (0, 0)),
                pl.BlockSpec((1, NUM_OUT), lambda i: (0, 0)),
            ],
            out_specs=pl.BlockSpec((B, NUM_OUT), lambda i: (0, 0)),
        ),
        compiler_params=pltpu.CompilerParams(
            dimension_semantics=("arbitrary",)),
    )(patches, conv_w_mat, conv_b_col, head_wt, head_b_row)


def _reference(x, conv_w, conv_b, head_w, head_b):
    """Plain-JAX f32 reference of the same forward pass."""
    out = jax.lax.conv_general_dilated(
        x, conv_w, window_strides=(1, 1), padding=((1, 1), (1, 1)),
        dimension_numbers=("NCHW", "OIHW", "NCHW"))
    out = jnp.maximum(out + conv_b[None, :, None, None], 0.0)
    pooled = out.mean(axis=(2, 3))                                   # [B, OC]
    return pooled @ head_w.T + head_b[None, :]


if __name__ == "__main__":
    B, C, H, W = 2, 4, 16, 16
    OC, NUM_OUT = 8, 10

    key = jax.random.PRNGKey(0)
    kx, kw1, kb1, kw2, kb2 = jax.random.split(key, 5)

    x = jax.random.normal(kx, (B, C, H, W), dtype=jnp.float32)
    conv_w = jax.random.normal(kw1, (OC, C, 3, 3), dtype=jnp.float32) * 0.1
    conv_b = jax.random.normal(kb1, (OC,), dtype=jnp.float32) * 0.1
    head_w = jax.random.normal(kw2, (NUM_OUT, OC), dtype=jnp.float32) * 0.1
    head_b = jax.random.normal(kb2, (NUM_OUT,), dtype=jnp.float32) * 0.1

    out = feature_extractor(x, conv_w, conv_b, head_w, head_b)
    out = jax.block_until_ready(out)

    ref = _reference(x, conv_w, conv_b, head_w, head_b)
    assert out.shape == (B, NUM_OUT)
    # bf16 MXU operands vs f32 reference -> loose tolerance.
    assert jnp.allclose(out, ref, atol=3e-2, rtol=3e-2), "mismatch vs reference"

    print("KERNEL_OK")
</pallas_src>

<mosaic_0001>
module attributes {stable_mosaic.version = 11 : i64} {
  func.func @feature_extractor_kernel(%arg0: i32, %arg1: memref<48x512xbf16, #tpu.memory_space<vmem>>, %arg2: memref<8x48xbf16, #tpu.memory_space<vmem>>, %arg3: memref<8x1xf32, #tpu.memory_space<vmem>>, %arg4: memref<8x10xf32, #tpu.memory_space<vmem>>, %arg5: memref<1x10xf32, #tpu.memory_space<vmem>>, %arg6: memref<2x10xf32, #tpu.memory_space<vmem>>) attributes {dimension_semantics = [#tpu.dimension_semantics<arbitrary>], iteration_bounds = array<i64: 1>, scalar_prefetch = 0 : i64, scratch_operands = 0 : i64, tpu.core_type = #tpu.core_type<tc>, window_params = [{pipeline_mode = #tpu.pipeline_mode<synchronous>, transform_indices = @transform_0, window_bounds = array<i64: 48, 512>}, {pipeline_mode = #tpu.pipeline_mode<synchronous>, transform_indices = @transform_1, window_bounds = array<i64: 8, 48>}, {pipeline_mode = #tpu.pipeline_mode<synchronous>, transform_indices = @transform_2, window_bounds = array<i64: 8, 1>}, {pipeline_mode = #tpu.pipeline_mode<synchronous>, transform_indices = @transform_3, window_bounds = array<i64: 8, 10>}, {pipeline_mode = #tpu.pipeline_mode<synchronous>, transform_indices = @transform_4, window_bounds = array<i64: 1, 10>}, {pipeline_mode = #tpu.pipeline_mode<synchronous>, transform_indices = @transform_5, window_bounds = array<i64: 2, 10>}]} {
    %c0 = arith.constant 0 : index
    %c0_0 = arith.constant 0 : index
    %0 = vector.load %arg2[%c0, %c0_0] : memref<8x48xbf16, #tpu.memory_space<vmem>>, vector<8x48xbf16>
    %c0_1 = arith.constant 0 : index
    %c0_2 = arith.constant 0 : index
    %1 = vector.load %arg1[%c0_1, %c0_2] : memref<48x512xbf16, #tpu.memory_space<vmem>>, vector<48x512xbf16>
    %cst = arith.constant dense<0.000000e+00> : vector<8x512xf32>
    %2 = tpu.matmul %0, %1, %cst {dimension_numbers = #tpu.dot_dimension_numbers<[1], [0], [0], [1], [0, 0, 1, 1], [], []>} : vector<8x48xbf16>, vector<48x512xbf16>, vector<8x512xf32> -> vector<8x512xf32>
    %c0_3 = arith.constant 0 : index
    %c0_4 = arith.constant 0 : index
    %3 = vector.load %arg3[%c0_3, %c0_4] : memref<8x1xf32, #tpu.memory_space<vmem>>, vector<8x1xf32>
    %4 = vector.broadcast %3 : vector<8x1xf32> to vector<8x512xf32>
    %5 = arith.addf %2, %4 : vector<8x512xf32>
    %cst_5 = arith.constant 0.000000e+00 : f32
    %6 = vector.broadcast %cst_5 : f32 to vector<8x512xf32>
    %7 = arith.maximumf %5, %6 : vector<8x512xf32>
    %c0_6 = arith.constant 0 : index
    %c0_7 = arith.constant 0 : index
    %8 = vector.load %arg4[%c0_6, %c0_7] : memref<8x10xf32, #tpu.memory_space<vmem>>, vector<8x10xf32>
    %9 = vector.extract_strided_slice %7 {offsets = [0, 0], sizes = [8, 256], strides = [1, 1]} : vector<8x512xf32> to vector<8x256xf32>
    %cst_8 = arith.constant dense<0.000000e+00> : vector<8xf32>
    %10 = vector.multi_reduction <add>, %9, %cst_8 [1] : vector<8x256xf32> to vector<8xf32>
    %11 = vector.shape_cast %10 : vector<8xf32> to vector<8x1xf32>
    %cst_9 = arith.constant 3.906250e-03 : f32
    %12 = vector.broadcast %cst_9 : f32 to vector<8x1xf32>
    %13 = arith.mulf %11, %12 : vector<8x1xf32>
    %14 = vector.broadcast %13 : vector<8x1xf32> to vector<8x10xf32>
    %15 = arith.mulf %14, %8 : vector<8x10xf32>
    %cst_10 = arith.constant dense<0.000000e+00> : vector<10xf32>
    %16 = vector.multi_reduction <add>, %15, %cst_10 [0] : vector<8x10xf32> to vector<10xf32>
    %17 = vector.shape_cast %16 : vector<10xf32> to vector<1x10xf32>
    %18 = vector.extract_strided_slice %7 {offsets = [0, 256], sizes = [8, 256], strides = [1, 1]} : vector<8x512xf32> to vector<8x256xf32>
    %cst_11 = arith.constant dense<0.000000e+00> : vector<8xf32>
    %19 = vector.multi_reduction <add>, %18, %cst_11 [1] : vector<8x256xf32> to vector<8xf32>
    %20 = vector.shape_cast %19 : vector<8xf32> to vector<8x1xf32>
    %cst_12 = arith.constant 3.906250e-03 : f32
    %21 = vector.broadcast %cst_12 : f32 to vector<8x1xf32>
    %22 = arith.mulf %20, %21 : vector<8x1xf32>
    %23 = vector.broadcast %22 : vector<8x1xf32> to vector<8x10xf32>
    %24 = arith.mulf %23, %8 : vector<8x10xf32>
    %cst_13 = arith.constant dense<0.000000e+00> : vector<10xf32>
    %25 = vector.multi_reduction <add>, %24, %cst_13 [0] : vector<8x10xf32> to vector<10xf32>
    %26 = vector.shape_cast %25 : vector<10xf32> to vector<1x10xf32>
    %27 = tpu.concatenate %17, %26 in 0 : vector<1x10xf32>, vector<1x10xf32> -> vector<2x10xf32>
    %c0_14 = arith.constant 0 : index
    %c0_15 = arith.constant 0 : index
    %28 = vector.load %arg5[%c0_14, %c0_15] : memref<1x10xf32, #tpu.memory_space<vmem>>, vector<1x10xf32>
    %29 = vector.broadcast %28 : vector<1x10xf32> to vector<2x10xf32>
    %30 = arith.addf %27, %29 : vector<2x10xf32>
    %c0_16 = arith.constant 0 : index
    %c0_17 = arith.constant 0 : index
    %31 = vector.load %arg6[%c0_16, %c0_17] : memref<2x10xf32, #tpu.memory_space<vmem>>, vector<2x10xf32>
    tpu.vector_store %arg6[%c0_16, %c0_17], %30 {strides = array<i32>} : memref<2x10xf32, #tpu.memory_space<vmem>>, vector<2x10xf32>,
    return
  }
  func.func @transform_0(%arg0: i32) -> (i32, i32) {
    %c0_i32 = arith.constant 0 : i32
    %c0_i32_0 = arith.constant 0 : i32
    %c0_i32_1 = arith.constant 0 : i32
    return %c0_i32, %c0_i32_0 : i32, i32
  }
  func.func @transform_1(%arg0: i32) -> (i32, i32) {
    %c0_i32 = arith.constant 0 : i32
    %c0_i32_0 = arith.constant 0 : i32
    %c0_i32_1 = arith.constant 0 : i32
    return %c0_i32, %c0_i32_0 : i32, i32
  }
  func.func @transform_2(%arg0: i32) -> (i32, i32) {
    %c0_i32 = arith.constant 0 : i32
    %c0_i32_0 = arith.constant 0 : i32
    %c0_i32_1 = arith.constant 0 : i32
    return %c0_i32, %c0_i32_0 : i32, i32
  }
  func.func @transform_3(%arg0: i32) -> (i32, i32) {
    %c0_i32 = arith.constant 0 : i32
    %c0_i32_0 = arith.constant 0 : i32
    %c0_i32_1 = arith.constant 0 : i32
    return %c0_i32, %c0_i32_0 : i32, i32
  }
  func.func @transform_4(%arg0: i32) -> (i32, i32) {
    %c0_i32 = arith.constant 0 : i32
    %c0_i32_0 = arith.constant 0 : i32
    %c0_i32_1 = arith.constant 0 : i32
    return %c0_i32, %c0_i32_0 : i32, i32
  }
  func.func @transform_5(%arg0: i32) -> (i32, i32) {
    %c0_i32 = arith.constant 0 : i32
    %c0_i32_0 = arith.constant 0 : i32
    %c0_i32_1 = arith.constant 0 : i32
    return %c0_i32, %c0_i32_0 : i32, i32
  }
}

</mosaic_0001>

<llo_original>
// kernel: tpu_custom_call.1
$region0: #{tpu_custom_call.1}
  #allocation0 [shape = 'u32[]', space=smem, size = 0x4, offset = 0x4, fixed_abs, tag = 'smem constant byte address 0x4 - core index']
  #allocation1 [shape = 'u32[144,128]{1,0:T(1,128)}', space=vmem, size = 0x12000, scoped, tag = 'internal scratch']
  %s0 = inlined_call_operand.hbm [shape: bf16[48,512], index: 0, kind: input, shape index: {}]
  %s1 = inlined_call_operand.vmem [shape: bf16[8,48], index: 1, kind: input, shape index: {}]
  %s2 = inlined_call_operand.vmem [shape: f32[8,1], index: 2, kind: input, shape index: {}]
  %s3 = inlined_call_operand.vmem [shape: f32[8,10], index: 3, kind: input, shape index: {}]
  %s4 = inlined_call_operand.vmem [shape: f32[1,10], index: 4, kind: input, shape index: {}]
  %s5 = inlined_call_operand.hbm [shape: f32[2,10], index: 5, kind: output, shape index: {}]
  %s6 = sld [smem:[#allocation0]]
  $region34: #{tpu_custom_call.1} parent=0
    _
  %s8 = ssub.s32 1, %s6
  %s9 = scalar_select 0, %s8, %s6
  $region1: #{tpu_custom_call.1} parent=0
    #allocation2 [shape = 'u8[49152]{0}', space=vmem, size = 0xc000, scoped, tag = 'input window, operand 0, single buffered']
    #allocation3 [shape = 's32[1]{0}', space=sflag, size = 0x4, scoped, tag = 'scoped memory for tpu_custom_call.1']
    #allocation4 [shape = 's32[1]{0}', space=sflag, size = 0x4, scoped, tag = 'scoped memory for tpu_custom_call.1']
    #allocation5 [shape = 'u8[1024]{0}', space=vmem, size = 0x400, scoped, tag = 'output window, operand 0, single buffered']
    %10 = vsyncpa [#allocation3], 0
    %11 = vsyncpa [#allocation4], 0
    // Predicated region
    $region2: #{tpu_custom_call.1} parent=1 // pred_check
      _
    $region3: #{tpu_custom_call.1} parent=1 // pred_check_branch
      %13 = sbr.rel (0) target = $region5
    $region4: #{tpu_custom_call.1} parent=1 // pred_region
      %s15 = ssub.s32 1536, 1536
      %16 = vsyncadd [#allocation3], %s15
      %s17 = sshll.u32 [#allocation2], 4
      %s18 = int_to_ptr.vmem [resolvable:$true] %s17
      %23 = dma.hbm_to_vmem [thread:$0]  %s0, 1536, %s18, [#allocation3], 256, 256, 16
    $region5: #{tpu_custom_call.1} parent=1 // pred_fallthru
      _
    // Predicated region
    $region6: #{tpu_custom_call.1} parent=1 // pred_check
      _
    $region7: #{tpu_custom_call.1} parent=1 // pred_check_branch
      %25 = sbr.rel (0) target = $region9
    $region8: #{tpu_custom_call.1} parent=1 // pred_region
      _
    $region9: #{tpu_custom_call.1} parent=1 // pred_fallthru
      _
    // Predicated region
    $region10: #{tpu_custom_call.1} parent=1 // pred_check
      _
    $region11: #{tpu_custom_call.1} parent=1 // pred_check_branch
      %27 = sbr.rel (0) target = $region13
    $region12: #{tpu_custom_call.1} parent=1 // pred_region
      _
    $region13: #{tpu_custom_call.1} parent=1 // pred_fallthru
      _
    // Predicated region
    $region14: #{tpu_custom_call.1} parent=1 // pred_check
      _
    $region15: #{tpu_custom_call.1} parent=1 // pred_check_branch
      %29 = sbr.rel (0) target = $region17
    $region16: #{tpu_custom_call.1} parent=1 // pred_region
      _
    $region17: #{tpu_custom_call.1} parent=1 // pred_fallthru
      _
    // Predicated region
    $region18: #{tpu_custom_call.1} parent=1 // pred_check
      _
    $region19: #{tpu_custom_call.1} parent=1 // pred_check_branch
      %31 = sbr.rel (0) target = $region21
    $region20: #{tpu_custom_call.1} parent=1 // pred_region
      _
    $region21: #{tpu_custom_call.1} parent=1 // pred_fallthru
      _
    // Predicated region
    $region22: #{tpu_custom_call.1} parent=1 // pred_check
      _
    $region23: #{tpu_custom_call.1} parent=1 // pred_check_branch
      %33 = sbr.rel (0) target = $region25
    $region24: #{tpu_custom_call.1} parent=1 // pred_region
      %34 = dma.done [#allocation3], 1536
    $region25: #{tpu_custom_call.1} parent=1 // pred_fallthru
      _
    %v36 = vld [vmem:[%s1] sm:$0xf]
    %v37 = vld [vmem:[#allocation2] sm:$0xff]
    %v38 = vld [vmem:[#allocation2 + $0x8] sm:$0xff]
    %v39 = vld [vmem:[#allocation2 + $0x10] sm:$0xff]
    %v40 = vld [vmem:[#allocation2 + $0x18] sm:$0xff]
    %v41 = vld [vmem:[#allocation2 + $0x20] sm:$0xff]
    %v42 = vld [vmem:[#allocation2 + $0x28] sm:$0xff]
    %v43 = vld [vmem:[#allocation2 + $0x30] sm:$0xff]
    %v44 = vld [vmem:[#allocation2 + $0x38] sm:$0xff]
    %v45 = vld [vmem:[#allocation2 + $0x40] sm:$0xff]
    %v46 = vld [vmem:[#allocation2 + $0x48] sm:$0xff]
    %v47 = vld [vmem:[#allocation2 + $0x50] sm:$0xff]
    %v48 = vld [vmem:[#allocation2 + $0x58] sm:$0xff]
    %v49 = vld [vmem:[%s2] sm:$0xff]
    %51 = vset.pattern.permute.xlu0 0
    %52 = vperm.xlu0 %51, %v49
    %v53 = vpop.permute.xlu0 %52
    %v67 = vunpack.c.l.b16 %v37
    %v68 = vunpack.c.h.b16 %v37
    %v69 = vunpack.c.l.b16 %v38
    %v70 = vunpack.c.h.b16 %v38
    %v71 = vunpack.c.l.b16 %v39
    %v72 = vunpack.c.h.b16 %v39
    %v73 = vunpack.c.l.b16 %v40
    %v74 = vunpack.c.h.b16 %v40
    %v75 = vunpack.c.l.b16 %v41
    %v76 = vunpack.c.h.b16 %v41
    %v77 = vunpack.c.l.b16 %v42
    %v78 = vunpack.c.h.b16 %v42
    %v79 = vunpack.c.l.b16 %v43
    %v80 = vunpack.c.h.b16 %v43
    %v81 = vunpack.c.l.b16 %v44
    %v82 = vunpack.c.h.b16 %v44
    %v83 = vunpack.c.l.b16 %v45
    %v84 = vunpack.c.h.b16 %v45
    %v85 = vunpack.c.l.b16 %v46
    %v86 = vunpack.c.h.b16 %v46
    %v87 = vunpack.c.l.b16 %v47
    %v88 = vunpack.c.h.b16 %v47
    %v89 = vunpack.c.l.b16 %v48
    %v90 = vunpack.c.h.b16 %v48
    %v91 = vpack.c.b16 %v71, %v67
    %v92 = vpack.c.b16 %v72, %v68
    %v93 = vpack.c.b16 %v73, %v69
    %v94 = vpack.c.b16 %v74, %v70
    %v95 = vpack.c.b16 %v79, %v75
    %v96 = vpack.c.b16 %v80, %v76
    %v97 = vpack.c.b16 %v81, %v77
    %v98 = vpack.c.b16 %v82, %v78
    %v99 = vpack.c.b16 %v87, %v83
    %v100 = vpack.c.b16 %v88, %v84
    %v101 = vpack.c.b16 %v89, %v85
    %v102 = vpack.c.b16 %v90, %v86
    %vm115 = vcmask 392192
    %v117 = vsel %vm115, %v36, 0
    %119 = vmatprep.subr.bf16.mxu0 %v92
    %120 = vmatpush1.bf16.msra.mxu0 %v91
    %121 = vmatprep.subr.bf16.mxu0 %v96
    %122 = vmatpush1.bf16.msra.mxu0 %v95
    %123 = vmatprep.subr.bf16.mxu0 %v100
    %124 = vmatpush1.bf16.msra.mxu0 %v99
    %125 = vmatprep.subr.bf16.mxu0 0
    %126 = vmatpush1.bf16.msra.mxu0 0
    %127 = vmatprep.subr.bf16.mxu0 0
    %128 = vmatpush1.bf16.msra.mxu0 0
    %129 = vmatprep.subr.bf16.mxu0 0
    %130 = vmatpush1.bf16.msra.mxu0 0
    %131 = vmatprep.subr.bf16.mxu0 0
    %132 = vmatpush1.bf16.msra.mxu0 0
    %133 = vmatprep.subr.bf16.mxu0 0
    %134 = vmatpush1.bf16.msra.mxu0 0
    %135 = vmatprep.subr.bf16.mxu0 0
    %136 = vmatpush1.bf16.msra.mxu0 0
    %137 = vmatprep.subr.bf16.mxu0 0
    %138 = vmatpush1.bf16.msra.mxu0 0
    %139 = vmatprep.subr.bf16.mxu0 0
    %140 = vmatpush1.bf16.msra.mxu0 0
    %141 = vmatprep.subr.bf16.mxu0 0
    %142 = vmatpush1.bf16.msra.mxu0 0
    %143 = vmatprep.subr.bf16.mxu0 0
    %144 = vmatpush1.bf16.msra.mxu0 0
    %145 = vmatprep.subr.bf16.mxu0 0
    %146 = vmatpush1.bf16.msra.mxu0 0
    %147 = vmatprep.subr.bf16.mxu0 0
    %148 = vmatpush1.bf16.msra.mxu0 0
    %149 = vmatprep.subr.bf16.mxu0 0
    %150 = vmatpush1.bf16.msra.mxu0 0
    %151 = vmatprep.mubr.bf16.mxu0 0
    %152 = vmatmul.mubr.bf16.gmra.mrb[0].mxu0 %v117
    %v153 = vpop.f32.mrb[0].mxu0
    %v154 = vadd.f32 %v53, %v153
    %v155 = vpop.f32.mrb[0].mxu0
    %v156 = vadd.f32 %v53, %v155
    %v157 = vpop.f32.mrb[0].mxu0
    %v158 = vpop.f32.mrb[0].mxu0
    %159 = vdwg.mxu0
    %160 = vmatprep.subr.bf16.mxu0 %v94
    %161 = vmatpush1.bf16.msra.mxu0 %v93
    %162 = vmatprep.subr.bf16.mxu0 %v98
    %163 = vmatpush1.bf16.msra.mxu0 %v97
    %164 = vmatprep.subr.bf16.mxu0 %v102
    %165 = vmatpush1.bf16.msra.mxu0 %v101
    %166 = vmatprep.subr.bf16.mxu0 0
    %167 = vmatpush1.bf16.msra.mxu0 0
    %168 = vmatprep.subr.bf16.mxu0 0
    %169 = vmatpush1.bf16.msra.mxu0 0
    %170 = vmatprep.subr.bf16.mxu0 0
    %171 = vmatpush1.bf16.msra.mxu0 0
    %172 = vmatprep.subr.bf16.mxu0 0
    %173 = vmatpush1.bf16.msra.mxu0 0
    %174 = vmatprep.subr.bf16.mxu0 0
    %175 = vmatpush1.bf16.msra.mxu0 0
    %176 = vmatprep.subr.bf16.mxu0 0
    %177 = vmatpush1.bf16.msra.mxu0 0
    %178 = vmatprep.subr.bf16.mxu0 0
    %179 = vmatpush1.bf16.msra.mxu0 0
    %180 = vmatprep.subr.bf16.mxu0 0
    %181 = vmatpush1.bf16.msra.mxu0 0
    %182 = vmatprep.subr.bf16.mxu0 0
    %183 = vmatpush1.bf16.msra.mxu0 0
    %184 = vmatprep.subr.bf16.mxu0 0
    %185 = vmatpush1.bf16.msra.mxu0 0
    %186 = vmatprep.subr.bf16.mxu0 0
    %187 = vmatpush1.bf16.msra.mxu0 0
    %188 = vmatprep.subr.bf16.mxu0 0
    %189 = vmatpush1.bf16.msra.mxu0 0
    %190 = vmatprep.subr.bf16.mxu0 0
    %191 = vmatpush1.bf16.msra.mxu0 0
    %192 = vmatprep.mubr.bf16.mxu0 0
    %193 = vmatmul.mubr.bf16.gmra.mrb[0].mxu0 %v117
    %v194 = vpop.f32.mrb[0].mxu0
    %v195 = vadd.f32 %v53, %v194
    %v196 = vpop.f32.mrb[0].mxu0
    %v197 = vadd.f32 %v53, %v196
    %v198 = vpop.f32.mrb[0].mxu0
    %v199 = vpop.f32.mrb[0].mxu0
    %200 = vdwg.mxu0
    %v201 = vmax.f32 %v154, 0.0
    %v202 = vmax.f32 %v156, 0.0
    %v203 = vmax.f32 %v195, 0.0
    %v204 = vmax.f32 %v197, 0.0
    %v205 = vld [vmem:[%s3] sm:$0xff]
    %v206 = vadd.f32 %v201, %v202
    %207 = vadd.xlane.f32.xlu0 %v206
    %v208 = vpop.xlane.xlu0 %207
    %v209 = vmul.f32 %v208, 0.00390625
    %v210 = vmul.f32 %v209, %v205
    %vm211 = vcmask 80896
    %v212 = vsel %vm211, %v210, 0.0
    %v213 = vrot.slane %v212, 4
    %v214 = vadd.f32 %v212, %v213
    %v215 = vrot.slane %v214, 2
    %v216 = vadd.f32 %v214, %v215
    %v217 = vrot.slane %v216, 1
    %v218 = vadd.f32 %v216, %v217
    %v219 = vadd.f32 %v203, %v204
    %220 = vadd.xlane.f32.xlu0 %v219
    %v221 = vpop.xlane.xlu0 %220
    %v222 = vmul.f32 %v221, 0.00390625
    %v223 = vmul.f32 %v222, %v205
    %v224 = vsel %vm211, %v223, 0.0
    %v225 = vrot.slane %v224, 4
    %v226 = vadd.f32 %v224, %v225
    %v227 = vrot.slane %v226, 2
    %v228 = vadd.f32 %v226, %v227
    %v229 = vrot.slane %v228, 1
    %v230 = vadd.f32 %v228, %v229
    %vm231 = vcmask 1040384
    %v232 = vsel %vm231, %v218, %v230
    %v233 = vld [vmem:[%s4] sm:$0x1]
    %v235 = vlaneseq
    %v236 = vshrl.u32 %v235, 7
    %v237 = vsub.s32 0, %v236
    %v238 = vrot.slane %v233, %v237
    %v240 = vadd.f32 %v232, %v238
    %vm241 = vcmask 74752
    %242 = vst.msk [vmem:[#allocation5] sm:$0x3] %vm241, %v240
    // Predicated region
    $region26: #{tpu_custom_call.1} parent=1 // pred_check
      _
    $region27: #{tpu_custom_call.1} parent=1 // pred_check_branch
      %244 = sbr.rel (0) target = $region29
    $region28: #{tpu_custom_call.1} parent=1 // pred_region
      %s246 = ssub.s32 32, 32
      %247 = vsyncadd [#allocation4], %s246
      %s249 = sshll.u32 [#allocation5], 4
      %s250 = int_to_ptr.vmem [resolvable:$true] %s249
      %252 = dma.vmem_to_hbm [thread:$0]  %s250, 32, %s5, [#allocation4]
    $region29: #{tpu_custom_call.1} parent=1 // pred_fallthru
      _
    // Predicated region
    $region30: #{tpu_custom_call.1} parent=1 // pred_check
      _
    $region31: #{tpu_custom_call.1} parent=1 // pred_check_branch
      %254 = sbr.rel (0) target = $region33
    $region32: #{tpu_custom_call.1} parent=1 // pred_region
      %255 = dma.done [#allocation4], 32
    $region33: #{tpu_custom_call.1} parent=1 // pred_fallthru
      _
    %256 = vsyncpa [#allocation3], 1
    %257 = vsyncpa [#allocation4], 1

</llo_original>
